<compile_context>
chip_gen: v6e
topology: v6e:2x2x1
jax: 0.10.0
libtpu: 0.0.40
codegen_flags: <defaults>
</compile_context>

<pallas_src>
import functools
import math

import jax
import jax.numpy as jnp
from jax.experimental import pallas as pl
from jax.experimental.pallas import tpu as pltpu

# F.normalize(eps=1e-12) clamp, expressed on the squared norm:
#   v / max(||v||, 1e-12)  ==  v * rsqrt(max(||v||^2, 1e-24))
_EPS_SQ = 1e-24
_VMEM_TILE_BUDGET = 40 * 1024 * 1024   # double-buffered tile footprint target


def _round_up(x, m):
    return (x + m - 1) // m * m


# --------------------------------------------------------------------------
# Kernel 1: row-wise L2 normalization (done once per operand, bf16 output).
# Padding of the row axis is folded in via a masked tail tile (n_valid).
# --------------------------------------------------------------------------
def _row_normalize_kernel(w_ref, out_ref, *, block_rows, n_valid):
    w = w_ref[...].astype(jnp.float32)
    if n_valid is not None:
        # Tail tile may read past the true row count -> zero those rows.
        r0 = pl.program_id(0) * block_rows
        rid = r0 + jax.lax.broadcasted_iota(jnp.int32, (block_rows, 1), 0)
        w = jnp.where(rid < n_valid, w, 0.0)
    sumsq = jnp.sum(w * w, axis=-1, keepdims=True)
    inv = jax.lax.rsqrt(jnp.maximum(sumsq, _EPS_SQ))        # EUP
    out_ref[...] = (w * inv).astype(out_ref.dtype)


def _normalize_rows(w, *, block_rows, out_rows, out_dtype):
    n, k = w.shape
    n_valid = None if n == out_rows else n                  # mask only if padding
    return pl.pallas_call(
        functools.partial(_row_normalize_kernel,
                          block_rows=block_rows, n_valid=n_valid),
        out_shape=jax.ShapeDtypeStruct((out_rows, k), out_dtype),
        grid=(out_rows // block_rows,),
        in_specs=[pl.BlockSpec((block_rows, k), lambda i: (i, 0))],
        out_specs=pl.BlockSpec((block_rows, k), lambda i: (i, 0)),
        compiler_params=pltpu.CompilerParams(
            dimension_semantics=("parallel",)),
    )(w)


# --------------------------------------------------------------------------
# Kernel 2: ArcFace margin head (cosine matmul + margin + scale).
# Inputs are already row-normalized bf16; s is folded into the constants.
# --------------------------------------------------------------------------
def _arc_margin_kernel(xn_ref, wn_ref, label_ref, out_ref, *,
                       s, s_cos_m, s_sin_m, th, s_mm, easy_margin,
                       block_n, n_axis):
    # cosine = x_n @ w_n.T, contracted on the shared K axis of the native
    # (TN, K) weight layout (no transpose), f32 accumulation on the MXU.
    cosine = jax.lax.dot_general(
        xn_ref[...], wn_ref[...],
        dimension_numbers=(((1,), (1,)), ((), ())),
        preferred_element_type=jnp.float32)                  # (TB, TN)

    # ArcFace margin math (f32 VPU / EUP); s pre-folded into constants.
    s_cos = cosine * s
    sine = jnp.sqrt(jnp.maximum(1.0 - cosine * cosine, 0.0))
    s_phi = cosine * s_cos_m - sine * s_sin_m
    if easy_margin:
        s_phi = jnp.where(cosine > 0.0, s_phi, s_cos)
    else:
        s_phi = jnp.where(cosine > th, s_phi, s_cos - s_mm)

    # one-hot scatter via iota compare, offset by the global column origin.
    col0 = pl.program_id(n_axis) * block_n
    col_ids = col0 + jax.lax.broadcasted_iota(jnp.int32, cosine.shape, 1)
    is_target = col_ids == label_ref[...]                    # (TB,TN) vs (TB,1)

    out_ref[...] = jnp.where(is_target, s_phi, s_cos).astype(out_ref.dtype)


def arc_margin_product(x, weight, label, *, s=30.0, m=0.5, easy_margin=False,
                       matmul_dtype=jnp.bfloat16):
    """ArcMarginProduct forward.  x:(B,K), weight:(N,K), label:(B,) int."""
    B, K = x.shape
    N, K_w = weight.shape
    assert K == K_w

    cos_m = math.cos(m)
    sin_m = math.sin(m)
    th = math.cos(math.pi - m)
    mm = math.sin(math.pi - m) * m

    # ---- tile selection ----
    b8 = _round_up(B, 8)
    if b8 <= 512:
        tb = b8                                   # one batch tile, no waste
    else:
        cands = [512, 448, 384, 320, 256]         # minimize batch padding waste
        tb = min(cands, key=lambda t: (_round_up(b8, t), -t))
    tn = min(2048, _round_up(N, 128))             # lane-dense N tile

    def _fits(tb_, tn_):
        # double-buffered bf16 x + bf16 w + f32 out + labels
        return 2 * (tb_ * K * 2 + tn_ * K * 2 + tb_ * tn_ * 4 + tb_ * 4) \
            <= _VMEM_TILE_BUDGET
    while tn > 128 and not _fits(tb, tn):
        tn //= 2
    while tb > 16 and not _fits(tb, tn):
        tb = max(16, _round_up(tb // 2, 16))

    b_pad = _round_up(b8, tb)
    n_pad = _round_up(N, tn)

    # ---- x / label: small, explicit pad is cheap ----
    x_p = x if b_pad == B else jnp.pad(x, ((0, b_pad - B), (0, 0)))
    lbl = jnp.pad(label.astype(jnp.int32), (0, b_pad - B),
                  constant_values=-1).reshape(b_pad, 1)

    # Normalize x rows ONCE into bf16 (hoisted out of the N-tile sweep).
    x_n = _normalize_rows(x_p, block_rows=tb, out_rows=b_pad,
                          out_dtype=matmul_dtype)

    # Normalize weight rows ONCE into bf16.  For N >= TN the class-axis
    # padding is folded into the kernel (no full-weight HBM pad copy).
    if N >= tn:
        w_in = weight
    else:
        w_in = jnp.pad(weight, ((0, n_pad - N), (0, 0)))
    w_n = _normalize_rows(w_in, block_rows=tn, out_rows=n_pad,
                          out_dtype=matmul_dtype)

    # ---- grid order: keep the larger operand resident along the inner axis
    n_tiles = n_pad // tn
    b_tiles = b_pad // tb
    dma_n_outer = n_pad * K + n_tiles * b_pad * K     # weight once, x streamed
    dma_b_outer = b_pad * K + b_tiles * n_pad * K     # x once, weight streamed
    n_outer = dma_n_outer <= dma_b_outer

    if n_outer:        # N tiles outer, B tiles inner -> weight tile resident
        grid = (n_tiles, b_tiles)
        x_map = lambda j, i: (i, 0)
        w_map = lambda j, i: (j, 0)
        l_map = lambda j, i: (i, 0)
        o_map = lambda j, i: (i, j)
        n_axis = 0
    else:              # B tiles outer, N tiles inner -> x tile resident
        grid = (b_tiles, n_tiles)
        x_map = lambda i, j: (i, 0)
        w_map = lambda i, j: (j, 0)
        l_map = lambda i, j: (i, 0)
        o_map = lambda i, j: (i, j)
        n_axis = 1

    kernel = functools.partial(
        _arc_margin_kernel, s=float(s),
        s_cos_m=float(s) * cos_m, s_sin_m=float(s) * sin_m,
        th=th, s_mm=float(s) * mm,
        easy_margin=easy_margin, block_n=tn, n_axis=n_axis)

    cost = pl.CostEstimate(
        flops=2 * b_pad * n_pad * K,
        transcendentals=b_pad * n_pad,                 # per-element sqrt
        bytes_accessed=(2 * min(dma_n_outer, dma_b_outer)   # bf16 inputs
                        + 4 * b_pad * n_pad                 # f32 logits
                        + 4 * b_pad))                       # labels

    out = pl.pallas_call(
        kernel,
        out_shape=jax.ShapeDtypeStruct((b_pad, n_pad), jnp.float32),
        grid=grid,
        in_specs=[
            pl.BlockSpec((tb, K), x_map),    # normalized x tile (bf16)
            pl.BlockSpec((tn, K), w_map),    # normalized weight tile (bf16)
            pl.BlockSpec((tb, 1), l_map),    # label column
        ],
        out_specs=pl.BlockSpec((tb, tn), o_map),
        compiler_params=pltpu.CompilerParams(
            dimension_semantics=("parallel", "parallel"),
            vmem_limit_bytes=48 * 1024 * 1024),
        cost_estimate=cost,
    )(x_n, w_n, lbl)

    return out[:B, :N]


# --------------------------------------------------------------------------
# Pure-JAX reference mirroring the PyTorch forward (for sanity check).
# --------------------------------------------------------------------------
def _reference(x, weight, label, *, s=30.0, m=0.5, easy_margin=False,
               matmul_dtype=jnp.float32):
    x_n = x * jax.lax.rsqrt(
        jnp.maximum(jnp.sum(x * x, axis=1, keepdims=True), _EPS_SQ))
    w_n = weight * jax.lax.rsqrt(
        jnp.maximum(jnp.sum(weight * weight, axis=1, keepdims=True), _EPS_SQ))
    cosine = jnp.dot(x_n.astype(matmul_dtype), w_n.astype(matmul_dtype).T,
                     preferred_element_type=jnp.float32)
    sine = jnp.sqrt(jnp.clip(1.0 - cosine ** 2, 0.0, 1.0))
    cos_m, sin_m = math.cos(m), math.sin(m)
    th, mm = math.cos(math.pi - m), math.sin(math.pi - m) * m
    phi = cosine * cos_m - sine * sin_m
    phi = jnp.where(cosine > 0.0, phi, cosine) if easy_margin \
        else jnp.where(cosine > th, phi, cosine - mm)
    one_hot = jax.nn.one_hot(label, cosine.shape[1], dtype=cosine.dtype)
    return (one_hot * phi + (1.0 - one_hot) * cosine) * s


if __name__ == "__main__":
    key = jax.random.PRNGKey(0)
    k_x, k_w, k_l = jax.random.split(key, 3)

    B = 8
    in_features = 32
    out_features = 64

    x = jax.random.normal(k_x, (B, in_features), dtype=jnp.float32)

    # Deterministic xavier_uniform_-style init (out_features, in_features).
    bound = math.sqrt(6.0 / (in_features + out_features))
    weight = jax.random.uniform(
        k_w, (out_features, in_features), dtype=jnp.float32,
        minval=-bound, maxval=bound)

    label = jax.random.randint(k_l, (B,), 0, out_features, dtype=jnp.int32)

    out = arc_margin_product(x, weight, label, s=30.0, m=0.5, easy_margin=False)
    out = jax.block_until_ready(out)

    # Reference with the same bf16 rounding of the normalized matmul inputs
    # (accumulation stays f32 in both), so the threshold branch matches.
    # TODO(synk): for bit-level parity with the f32 PyTorch module, keep the
    # matmul inputs in f32 (at extra DMA/MXU cost) instead of bf16.
    ref = _reference(x, weight, label, s=30.0, m=0.5, easy_margin=False,
                     matmul_dtype=jnp.bfloat16)

    assert out.shape == (B, out_features)
    max_diff = float(jnp.max(jnp.abs(out - ref)))
    assert jnp.allclose(out, ref, atol=1e-2, rtol=1e-2), (
        f"mismatch vs reference, max abs diff = {max_diff}")

    print("KERNEL_OK")
</pallas_src>

<mosaic_0001>
module attributes {stable_mosaic.version = 11 : i64} {
  func.func @_row_normalize_kernel(%arg0: i32, %arg1: memref<8x32xf32, #tpu.memory_space<vmem>>, %arg2: memref<8x32xbf16, #tpu.memory_space<vmem>>) attributes {dimension_semantics = [#tpu.dimension_semantics<parallel>], iteration_bounds = array<i64: 1>, scalar_prefetch = 0 : i64, scratch_operands = 0 : i64, tpu.core_type = #tpu.core_type<tc>, window_params = [{transform_indices = @transform_0, window_bounds = array<i64: 8, 32>}, {transform_indices = @transform_1, window_bounds = array<i64: 8, 32>}]} {
    %c0 = arith.constant 0 : index
    %c0_0 = arith.constant 0 : index
    %0 = vector.load %arg1[%c0, %c0_0] : memref<8x32xf32, #tpu.memory_space<vmem>>, vector<8x32xf32>
    %1 = arith.mulf %0, %0 : vector<8x32xf32>
    %cst = arith.constant dense<0.000000e+00> : vector<8xf32>
    %2 = vector.multi_reduction <add>, %1, %cst [1] : vector<8x32xf32> to vector<8xf32>
    %3 = vector.shape_cast %2 : vector<8xf32> to vector<8x1xf32>
    %cst_1 = arith.constant 1.000000e-24 : f32
    %4 = vector.broadcast %cst_1 : f32 to vector<8x1xf32>
    %5 = arith.maximumf %3, %4 : vector<8x1xf32>
    %6 = math.rsqrt %5 : vector<8x1xf32>
    %7 = vector.broadcast %6 : vector<8x1xf32> to vector<8x32xf32>
    %8 = arith.mulf %0, %7 : vector<8x32xf32>
    %9 = arith.truncf %8 : vector<8x32xf32> to vector<8x32xbf16>
    %c0_2 = arith.constant 0 : index
    %c0_3 = arith.constant 0 : index
    %10 = vector.load %arg2[%c0_2, %c0_3] : memref<8x32xbf16, #tpu.memory_space<vmem>>, vector<8x32xbf16>
    tpu.vector_store %arg2[%c0_2, %c0_3], %9 {strides = array<i32>} : memref<8x32xbf16, #tpu.memory_space<vmem>>, vector<8x32xbf16>,
    return
  }
  func.func @transform_0(%arg0: i32) -> (i32, i32) {
    %c0_i32 = arith.constant 0 : i32
    %c0_i32_0 = arith.constant 0 : i32
    return %arg0, %c0_i32 : i32, i32
  }
  func.func @transform_1(%arg0: i32) -> (i32, i32) {
    %c0_i32 = arith.constant 0 : i32
    %c0_i32_0 = arith.constant 0 : i32
    return %arg0, %c0_i32 : i32, i32
  }
}

</mosaic_0001>

<llo_original>
// kernel: tpu_custom_call.1
$region0: #{tpu_custom_call.1}
  #allocation0 [shape = 'u32[]', space=smem, size = 0x4, offset = 0x4, fixed_abs, tag = 'smem constant byte address 0x4 - core index']
  #allocation1 [shape = 'u32[144,128]{1,0:T(1,128)}', space=vmem, size = 0x12000, scoped, tag = 'internal scratch']
  %s0 = inlined_call_operand.hbm [shape: f32[8,32], index: 0, kind: input, shape index: {}]
  %s1 = inlined_call_operand.hbm [shape: bf16[8,32], index: 1, kind: output, shape index: {}]
  %s2 = sld [smem:[#allocation0]]
  $region18: #{tpu_custom_call.1} parent=0
    _
  %s4 = ssub.s32 1, %s2
  %s5 = scalar_select 0, %s4, %s2
  $region1: #{tpu_custom_call.1} parent=0
    #allocation2 [shape = 'u8[4096]{0}', space=vmem, size = 0x1000, scoped, tag = 'input window, operand 0, single buffered']
    #allocation3 [shape = 's32[1]{0}', space=sflag, size = 0x4, scoped, tag = 'scoped memory for tpu_custom_call.1']
    #allocation4 [shape = 's32[1]{0}', space=sflag, size = 0x4, scoped, tag = 'scoped memory for tpu_custom_call.1']
    #allocation5 [shape = 'u8[2048]{0}', space=vmem, size = 0x800, scoped, tag = 'output window, operand 0, single buffered']
    %6 = vsyncpa [#allocation3], 0
    %7 = vsyncpa [#allocation4], 0
    // Predicated region
    $region2: #{tpu_custom_call.1} parent=1 // pred_check
      _
    $region3: #{tpu_custom_call.1} parent=1 // pred_check_branch
      %9 = sbr.rel (0) target = $region5
    $region4: #{tpu_custom_call.1} parent=1 // pred_region
      %s11 = ssub.s32 128, 128
      %12 = vsyncadd [#allocation3], %s11
      %s14 = sshll.u32 [#allocation2], 4
      %s15 = int_to_ptr.vmem [resolvable:$true] %s14
      %17 = dma.hbm_to_vmem [thread:$0]  %s0, 128, %s15, [#allocation3]
    $region5: #{tpu_custom_call.1} parent=1 // pred_fallthru
      _
    // Predicated region
    $region6: #{tpu_custom_call.1} parent=1 // pred_check
      _
    $region7: #{tpu_custom_call.1} parent=1 // pred_check_branch
      %19 = sbr.rel (0) target = $region9
    $region8: #{tpu_custom_call.1} parent=1 // pred_region
      %20 = dma.done [#allocation3], 128
    $region9: #{tpu_custom_call.1} parent=1 // pred_fallthru
      _
    %v21 = vld [vmem:[#allocation2] sm:$0xff]
    %v22 = vmul.f32 %v21, %v21
    %vm23 = vcmask 261120
    %v24 = vsel %vm23, %v22, 0.0
    %25 = vadd.xlane.f32.xlu0 %v24
    %v26 = vpop.xlane.xlu0 %25
    %v27 = vmax.f32 %v26, 1e-24
    %v28 = vrsqrt.pop %v27
    %v29 = vmul.f32 %v21, %v28
    %v30 = vpack.c.bf16 %v29, %v29
    %vm31 = vcmask 257024
    %32 = vst.msk [vmem:[#allocation5] sm:$0xf] %vm31, %v30
    // Predicated region
    $region10: #{tpu_custom_call.1} parent=1 // pred_check
      _
    $region11: #{tpu_custom_call.1} parent=1 // pred_check_branch
      %34 = sbr.rel (0) target = $region13
    $region12: #{tpu_custom_call.1} parent=1 // pred_region
      %s36 = ssub.s32 64, 64
      %37 = vsyncadd [#allocation4], %s36
      %s39 = sshll.u32 [#allocation5], 4
      %s40 = int_to_ptr.vmem [resolvable:$true] %s39
      %42 = dma.vmem_to_hbm [thread:$0]  %s40, 64, %s1, [#allocation4]
    $region13: #{tpu_custom_call.1} parent=1 // pred_fallthru
      _
    // Predicated region
    $region14: #{tpu_custom_call.1} parent=1 // pred_check
      _
    $region15: #{tpu_custom_call.1} parent=1 // pred_check_branch
      %44 = sbr.rel (0) target = $region17
    $region16: #{tpu_custom_call.1} parent=1 // pred_region
      %45 = dma.done [#allocation4], 64
    $region17: #{tpu_custom_call.1} parent=1 // pred_fallthru
      _
    %46 = vsyncpa [#allocation3], 1
    %47 = vsyncpa [#allocation4], 1

</llo_original>
